<compile_context>
chip_gen: v7x
topology: tpu7x:2x2x1
jax: 0.10.0
libtpu: 0.0.40
codegen_flags: <defaults>
</compile_context>

<pallas_src>
import jax
import jax.numpy as jnp
from jax import lax
from jax.experimental import pallas as pl
from jax.experimental.pallas import tpu as pltpu


# ----------------------------------------------------------------------------
# Helpers: generation-aware budgets and tile choices.
# ----------------------------------------------------------------------------
def _round_up(x, m):
    return ((x + m - 1) // m) * m


def _vmem_plan():
    """VMEM budgets keyed off the chip generation (v7x has 64 MiB per core;
    v5e/v6e have 128 MiB).  Falls back to the conservative 64 MiB plan."""
    try:
        cap = getattr(pltpu.get_tpu_info(), "vmem_capacity_bytes", None) or (64 << 20)
    except Exception:
        cap = 64 << 20
    if cap >= (128 << 20):
        return dict(vmem_limit=80 << 20, block_budget=48 << 20,
                    target_block=8 << 20, fused_max=48 << 20)
    return dict(vmem_limit=40 << 20, block_budget=20 << 20,
                target_block=4 << 20, fused_max=24 << 20)


def _choose_c_block(C):
    """Channel block for pass 1's parallel grid axis.  The pooled output is
    blocked over C, so a split block must be a multiple of 128 lanes."""
    for n in (4, 2):
        if C % (128 * n) == 0:
            return C // n
    return C


def _choose_hw_block(HW, per_lane_bytes, *, block_budget, target_block, min_tiles=4):
    """HW tile size (multiple of 128 lanes): fits the double-buffered in+out
    VMEM budget, is a few MiB to amortize per-step overhead, and (when HW
    allows) leaves >= min_tiles tiles so BlockSpec double-buffering and the
    megacore split on the scale pass stay active."""
    hw_pad = _round_up(HW, 128)
    cap_lanes = max(128, (block_budget // (4 * per_lane_bytes)) // 128 * 128)
    tgt_lanes = max(128, (target_block // per_lane_bytes) // 128 * 128)
    split_lanes = max(128, (hw_pad // min_tiles) // 128 * 128)
    return int(min(hw_pad, cap_lanes, tgt_lanes, split_lanes))


# ----------------------------------------------------------------------------
# Fused single-read kernel: x fully VMEM-resident, HBM traffic = read + write.
# ----------------------------------------------------------------------------
def _se_fused_kernel(x_ref, w1t_ref, w2t_ref, o_ref):
    pooled = jnp.sum(x_ref[...].astype(jnp.float32), axis=-1)     # (B, C); 1/HW in w1t
    h = jnp.maximum(jnp.dot(pooled, w1t_ref[...],
                            preferred_element_type=jnp.float32), 0.0)
    s = jax.nn.sigmoid(jnp.dot(h, w2t_ref[...],
                               preferred_element_type=jnp.float32))  # (B, C) f32
    o_ref[...] = x_ref[...] * s[:, :, None].astype(o_ref.dtype)


# ----------------------------------------------------------------------------
# Pass 1 (streaming path): tiled spatial sum -> pooled (B, C) f32.
# ----------------------------------------------------------------------------
def _make_pool_kernel(n_t, hw_block, HW):
    ragged = (HW % hw_block) != 0
    tail_start = (n_t - 1) * hw_block

    def kernel(x_ref, pooled_ref):
        t = pl.program_id(1)

        @pl.when(t == 0)
        def _init():
            pooled_ref[...] = jnp.zeros_like(pooled_ref)

        if ragged:
            # Only the last HW tile can contain out-of-bounds lanes (boundary
            # block padding is NOT guaranteed zero), so only it pays the mask.
            @pl.when(t < n_t - 1)
            def _full_tile():
                pooled_ref[...] += jnp.sum(x_ref[...].astype(jnp.float32), axis=-1)

            @pl.when(t == n_t - 1)
            def _tail_tile():
                xf = x_ref[...].astype(jnp.float32)
                lane = lax.broadcasted_iota(jnp.int32, xf.shape, dimension=2)
                xf = jnp.where(tail_start + lane < HW, xf, 0.0)
                pooled_ref[...] += jnp.sum(xf, axis=-1)
        else:
            pooled_ref[...] += jnp.sum(x_ref[...].astype(jnp.float32), axis=-1)

    return kernel


# ----------------------------------------------------------------------------
# Pass 2 (streaming path): out[b, c, hw] = x[b, c, hw] * s[b, c]  (native dtype).
# ----------------------------------------------------------------------------
def _se_scale_kernel(x_ref, s_ref, o_ref):
    o_ref[...] = x_ref[...] * s_ref[...]


# ----------------------------------------------------------------------------
# Wrapper
# ----------------------------------------------------------------------------
def se_attention_block(x_nchw, w1, w2, *, hw_block=None, use_fused=None,
                       donate_x=False):
    """x_nchw: (B, C, H, W); w1: (C//r, C); w2: (C, C//r) (PyTorch Linear layout).
    Output has the same dtype as x_nchw.  Set donate_x=True only when the
    caller actually donates x (writes the result in place)."""
    B, C, H, W = x_nchw.shape
    HW = H * W
    Cr = w1.shape[0]
    in_dtype = x_nchw.dtype
    itemsize = jnp.dtype(in_dtype).itemsize

    plan = _vmem_plan()

    x3 = x_nchw.reshape(B, C, HW)
    # Fold 1/HW into W1 (cast to f32 BEFORE dividing so bf16 weights don't lose
    # precision in the fold); the squeeze then becomes a plain sum.
    w1t = jnp.transpose(w1).astype(jnp.float32) / float(HW)   # (C, C//r)
    w2t = jnp.transpose(w2).astype(jnp.float32)               # (C//r, C)

    x_bytes = B * C * HW * itemsize
    if use_fused is None:
        # Conservative: in + out blocks plus a possible f32 temp for the
        # upcast-before-sum, plus weights and slack.
        fused_need = 2 * x_bytes + 4 * B * C * HW + 8 * C * Cr + (2 << 20)
        use_fused = fused_need <= plan["fused_max"]

    # ---- fused single-read path ------------------------------------------
    if use_fused:
        out3 = pl.pallas_call(
            _se_fused_kernel,
            out_shape=jax.ShapeDtypeStruct((B, C, HW), in_dtype),
            input_output_aliases=({0: 0} if donate_x else {}),
            compiler_params=pltpu.CompilerParams(
                vmem_limit_bytes=plan["vmem_limit"]),
        )(x3, w1t, w2t)
        return out3.reshape(B, C, H, W)

    # ---- streaming two-pass path ------------------------------------------
    c_blk = _choose_c_block(C)
    n_c = C // c_blk
    if hw_block is None:
        hw_block = _choose_hw_block(
            HW, B * c_blk * itemsize,
            block_budget=plan["block_budget"], target_block=plan["target_block"])
    assert hw_block % 128 == 0 or hw_block == HW, \
        "hw_block must be a multiple of 128 lanes (or the full HW extent)"
    n_t = int(pl.cdiv(HW, hw_block))
    # TODO(synk): very large B*C (per-lane footprint > target block at 128
    # lanes) would additionally need blocking over B; typical SE shapes don't.

    # pass 1: pooled channel sums, parallel over channel blocks (megacore),
    # reduction over HW tiles innermost; masked ragged tail.
    pooled = pl.pallas_call(
        _make_pool_kernel(n_t, hw_block, HW),
        out_shape=jax.ShapeDtypeStruct((B, C), jnp.float32),
        grid=(n_c, n_t),
        in_specs=[pl.BlockSpec((B, c_blk, hw_block), lambda c, t: (0, c, t))],
        out_specs=pl.BlockSpec((B, c_blk), lambda c, t: (0, c)),
        compiler_params=pltpu.CompilerParams(
            dimension_semantics=("parallel", "arbitrary"),
            vmem_limit_bytes=plan["vmem_limit"]),
    )(x3)

    # Tiny excitation MLP on (B, C): plain XLA (negligible vs. the HBM passes).
    h = jnp.maximum(pooled @ w1t, 0.0)
    s = jax.nn.sigmoid(h @ w2t)                                # (B, C) f32
    s3 = s.astype(in_dtype).reshape(B, C, 1)

    # pass 2: streaming scale, lane-dense tiles, parallel grid, optional
    # in-place write via input/output aliasing.
    out3 = pl.pallas_call(
        _se_scale_kernel,
        out_shape=jax.ShapeDtypeStruct((B, C, HW), in_dtype),
        grid=(n_t,),
        in_specs=[pl.BlockSpec((B, C, hw_block), lambda t: (0, 0, t)),
                  pl.BlockSpec((B, C, 1), lambda t: (0, 0, 0))],
        out_specs=pl.BlockSpec((B, C, hw_block), lambda t: (0, 0, t)),
        input_output_aliases=({0: 0} if donate_x else {}),
        compiler_params=pltpu.CompilerParams(
            dimension_semantics=("parallel",),
            vmem_limit_bytes=plan["vmem_limit"]),
    )(x3, s3)

    return out3.reshape(B, C, H, W)


def _reference(x, w1, w2):
    pooled = jnp.mean(x, axis=(2, 3))                      # (B, C)
    h = jnp.maximum(pooled @ w1.T, 0.0)                    # (B, C//r)
    s = jax.nn.sigmoid(h @ w2.T)                           # (B, C)
    return x * s[:, :, None, None]


if __name__ == "__main__":
    B, C, reduction = 2, 64, 16
    Cr = C // reduction

    key = jax.random.PRNGKey(0)
    kx, kx2, k1, k2 = jax.random.split(key, 4)

    # PyTorch Linear layout: (out_features, in_features), no biases.
    bound1 = 1.0 / jnp.sqrt(C)
    bound2 = 1.0 / jnp.sqrt(Cr)
    w1 = jax.random.uniform(k1, (Cr, C), minval=-bound1, maxval=bound1,
                            dtype=jnp.float32)
    w2 = jax.random.uniform(k2, (C, Cr), minval=-bound2, maxval=bound2,
                            dtype=jnp.float32)

    # 1) Small f32 input -> fused single-read path (x VMEM-resident).
    x = jax.random.normal(kx, (B, C, 16, 16), dtype=jnp.float32)
    out = jax.block_until_ready(se_attention_block(x, w1, w2))
    ref = _reference(x, w1, w2)
    assert out.shape == x.shape and out.dtype == x.dtype
    assert jnp.allclose(out, ref, atol=1e-5, rtol=1e-5), "fused f32 mismatch"

    # 2) Forced streaming two-pass path on a ragged spatial size
    #    (H=W=17 -> HW=289: two full 128-lane tiles + one masked 33-lane tail).
    x_r = jax.random.normal(kx2, (B, C, 17, 17), dtype=jnp.float32)
    out_r = jax.block_until_ready(
        se_attention_block(x_r, w1, w2, use_fused=False, hw_block=128))
    ref_r = _reference(x_r, w1, w2)
    assert jnp.allclose(out_r, ref_r, atol=1e-5, rtol=1e-5), "ragged f32 mismatch"

    # 3) bf16 I/O through the streaming path (auto tile choice, masked tail);
    #    accumulation / MLP stay f32, the scale multiply runs natively in bf16.
    x_bf = x_r.astype(jnp.bfloat16)
    out_bf = jax.block_until_ready(
        se_attention_block(x_bf, w1, w2, use_fused=False))
    ref_bf = _reference(x_bf.astype(jnp.float32), w1, w2)
    assert out_bf.dtype == jnp.bfloat16
    assert jnp.allclose(out_bf.astype(jnp.float32), ref_bf,
                        atol=3e-2, rtol=3e-2), "bf16 mismatch"

    print("KERNEL_OK")
</pallas_src>

<mosaic_0001>
module attributes {stable_mosaic.version = 11 : i64} {
  func.func @_se_fused_kernel(%arg0: memref<2x64x256xf32, #tpu.memory_space<vmem>>, %arg1: memref<64x4xf32, #tpu.memory_space<vmem>>, %arg2: memref<4x64xf32, #tpu.memory_space<vmem>>, %arg3: memref<2x64x256xf32, #tpu.memory_space<vmem>>) attributes {dimension_semantics = [], scalar_prefetch = 0 : i64, scratch_operands = 0 : i64, tpu.core_type = #tpu.core_type<tc>} {
    %c0 = arith.constant 0 : index
    %c0_0 = arith.constant 0 : index
    %c0_1 = arith.constant 0 : index
    %0 = vector.load %arg0[%c0, %c0_0, %c0_1] : memref<2x64x256xf32, #tpu.memory_space<vmem>>, vector<2x64x256xf32>
    %cst = arith.constant dense<0.000000e+00> : vector<2x64xf32>
    %1 = vector.multi_reduction <add>, %0, %cst [2] : vector<2x64x256xf32> to vector<2x64xf32>
    %c0_2 = arith.constant 0 : index
    %c0_3 = arith.constant 0 : index
    %2 = vector.load %arg1[%c0_2, %c0_3] : memref<64x4xf32, #tpu.memory_space<vmem>>, vector<64x4xf32>
    %cst_4 = arith.constant dense<0.000000e+00> : vector<2x4xf32>
    %3 = tpu.matmul %1, %2, %cst_4 {dimension_numbers = #tpu.dot_dimension_numbers<[1], [0], [0], [1], [0, 0, 1, 1], [], []>} : vector<2x64xf32>, vector<64x4xf32>, vector<2x4xf32> -> vector<2x4xf32>
    %cst_5 = arith.constant 0.000000e+00 : f32
    %4 = vector.broadcast %cst_5 : f32 to vector<2x4xf32>
    %5 = arith.maximumf %3, %4 : vector<2x4xf32>
    %c0_6 = arith.constant 0 : index
    %c0_7 = arith.constant 0 : index
    %6 = vector.load %arg2[%c0_6, %c0_7] : memref<4x64xf32, #tpu.memory_space<vmem>>, vector<4x64xf32>
    %cst_8 = arith.constant dense<0.000000e+00> : vector<2x64xf32>
    %7 = tpu.matmul %5, %6, %cst_8 {dimension_numbers = #tpu.dot_dimension_numbers<[1], [0], [0], [1], [0, 0, 1, 1], [], []>} : vector<2x4xf32>, vector<4x64xf32>, vector<2x64xf32> -> vector<2x64xf32>
    %8 = arith.negf %7 : vector<2x64xf32>
    %9 = math.exp %8 : vector<2x64xf32>
    %cst_9 = arith.constant 1.000000e+00 : f32
    %10 = vector.broadcast %cst_9 : f32 to vector<2x64xf32>
    %11 = arith.addf %10, %9 : vector<2x64xf32>
    %12 = arith.divf %10, %11 : vector<2x64xf32>
    %c0_10 = arith.constant 0 : index
    %c0_11 = arith.constant 0 : index
    %c0_12 = arith.constant 0 : index
    %13 = vector.load %arg0[%c0_10, %c0_11, %c0_12] : memref<2x64x256xf32, #tpu.memory_space<vmem>>, vector<2x64x256xf32>
    %14 = vector.shape_cast %12 : vector<2x64xf32> to vector<2x64x1xf32>
    %15 = vector.broadcast %14 : vector<2x64x1xf32> to vector<2x64x256xf32>
    %16 = arith.mulf %13, %15 : vector<2x64x256xf32>
    %c0_13 = arith.constant 0 : index
    %c0_14 = arith.constant 0 : index
    %c0_15 = arith.constant 0 : index
    %17 = vector.load %arg3[%c0_13, %c0_14, %c0_15] : memref<2x64x256xf32, #tpu.memory_space<vmem>>, vector<2x64x256xf32>
    tpu.vector_store %arg3[%c0_13, %c0_14, %c0_15], %16 {strides = array<i32>} : memref<2x64x256xf32, #tpu.memory_space<vmem>>, vector<2x64x256xf32>,
    return
  }
}

</mosaic_0001>

<llo_original>
// kernel: tpu_custom_call.1
$region0: #{tpu_custom_call.1}
  #allocation0 [shape = 'u32[]', space=smem, size = 0x4, offset = 0x4, fixed_abs, tag = 'smem constant byte address 0x4 - core index']
  #allocation1 [shape = 'u32[144,128]{1,0:T(1,128)}', space=vmem, size = 0x12000, scoped, tag = 'internal scratch']
  %s0 = inlined_call_operand.hbm [shape: f32[2,64,256], index: 0, kind: input, shape index: {}]
  %s1 = inlined_call_operand.vmem [shape: f32[64,4], index: 1, kind: input, shape index: {}]
  %s2 = inlined_call_operand.vmem [shape: f32[4,64], index: 2, kind: input, shape index: {}]
  %s3 = inlined_call_operand.hbm [shape: f32[2,64,256], index: 3, kind: output, shape index: {}]
  %s4 = sld [smem:[#allocation0]]
  $region26: #{tpu_custom_call.1} parent=0
    _
  %s6 = ssub.s32 1, %s4
  %s7 = scalar_select 0, %s6, %s4
  $region1: #{tpu_custom_call.1} parent=0
    #allocation2 [shape = 'u8[131072]{0}', space=vmem, size = 0x20000, scoped, tag = 'input window, operand 0, single buffered']
    #allocation3 [shape = 's32[1]{0}', space=sflag, size = 0x4, scoped, tag = 'scoped memory for tpu_custom_call.1']
    #allocation4 [shape = 's32[1]{0}', space=sflag, size = 0x4, scoped, tag = 'scoped memory for tpu_custom_call.1']
    #allocation5 [shape = 'u8[131072]{0}', space=vmem, size = 0x20000, scoped, tag = 'output window, operand 0, single buffered']
    %8 = vsyncpa [#allocation3], 0
    %9 = vsyncpa [#allocation4], 0
    // Predicated region
    $region2: #{tpu_custom_call.1} parent=1 // pred_check
      _
    $region3: #{tpu_custom_call.1} parent=1 // pred_check_branch
      %11 = sbr.rel (0) target = $region5
    $region4: #{tpu_custom_call.1} parent=1 // pred_region
      %s13 = ssub.s32 4096, 4096
      %14 = vsyncadd [#allocation3], %s13
      %s15 = sshll.u32 [#allocation2], 4
      %s16 = int_to_ptr.vmem [resolvable:$true] %s15
      %21 = dma.hbm_to_vmem [thread:$0]  %s0, 4096, %s16, [#allocation3], 256, 256, 16
    $region5: #{tpu_custom_call.1} parent=1 // pred_fallthru
      _
    // Predicated region
    $region6: #{tpu_custom_call.1} parent=1 // pred_check
      _
    $region7: #{tpu_custom_call.1} parent=1 // pred_check_branch
      %23 = sbr.rel (0) target = $region9
    $region8: #{tpu_custom_call.1} parent=1 // pred_region
      _
    $region9: #{tpu_custom_call.1} parent=1 // pred_fallthru
      _
    // Predicated region
    $region10: #{tpu_custom_call.1} parent=1 // pred_check
      _
    $region11: #{tpu_custom_call.1} parent=1 // pred_check_branch
      %25 = sbr.rel (0) target = $region13
    $region12: #{tpu_custom_call.1} parent=1 // pred_region
      _
    $region13: #{tpu_custom_call.1} parent=1 // pred_fallthru
      _
    // Predicated region
    $region14: #{tpu_custom_call.1} parent=1 // pred_check
      _
    $region15: #{tpu_custom_call.1} parent=1 // pred_check_branch
      %27 = sbr.rel (0) target = $region17
    $region16: #{tpu_custom_call.1} parent=1 // pred_region
      %28 = dma.done [#allocation3], 4096
    $region17: #{tpu_custom_call.1} parent=1 // pred_fallthru
      _
    %v29 = vld [vmem:[#allocation2] sm:$0xff]
    %v30 = vld [vmem:[#allocation2 + $0x8] sm:$0xff]
    %v31 = vld [vmem:[#allocation2 + $0x10] sm:$0xff]
    %v32 = vld [vmem:[#allocation2 + $0x18] sm:$0xff]
    %v33 = vld [vmem:[#allocation2 + $0x20] sm:$0xff]
    %v34 = vld [vmem:[#allocation2 + $0x28] sm:$0xff]
    %v35 = vld [vmem:[#allocation2 + $0x30] sm:$0xff]
    %v36 = vld [vmem:[#allocation2 + $0x38] sm:$0xff]
    %v37 = vld [vmem:[#allocation2 + $0x40] sm:$0xff]
    %v38 = vld [vmem:[#allocation2 + $0x48] sm:$0xff]
    %v39 = vld [vmem:[#allocation2 + $0x50] sm:$0xff]
    %v40 = vld [vmem:[#allocation2 + $0x58] sm:$0xff]
    %v41 = vld [vmem:[#allocation2 + $0x60] sm:$0xff]
    %v42 = vld [vmem:[#allocation2 + $0x68] sm:$0xff]
    %v43 = vld [vmem:[#allocation2 + $0x70] sm:$0xff]
    %v44 = vld [vmem:[#allocation2 + $0x78] sm:$0xff]
    %v45 = vld [vmem:[#allocation2 + $0x80] sm:$0xff]
    %v46 = vld [vmem:[#allocation2 + $0x88] sm:$0xff]
    %v47 = vld [vmem:[#allocation2 + $0x90] sm:$0xff]
    %v48 = vld [vmem:[#allocation2 + $0x98] sm:$0xff]
    %v49 = vld [vmem:[#allocation2 + $0xa0] sm:$0xff]
    %v50 = vld [vmem:[#allocation2 + $0xa8] sm:$0xff]
    %v51 = vld [vmem:[#allocation2 + $0xb0] sm:$0xff]
    %v52 = vld [vmem:[#allocation2 + $0xb8] sm:$0xff]
    %v53 = vld [vmem:[#allocation2 + $0xc0] sm:$0xff]
    %v54 = vld [vmem:[#allocation2 + $0xc8] sm:$0xff]
    %v55 = vld [vmem:[#allocation2 + $0xd0] sm:$0xff]
    %v56 = vld [vmem:[#allocation2 + $0xd8] sm:$0xff]
    %v57 = vld [vmem:[#allocation2 + $0xe0] sm:$0xff]
    %v58 = vld [vmem:[#allocation2 + $0xe8] sm:$0xff]
    %v59 = vld [vmem:[#allocation2 + $0xf0] sm:$0xff]
    %v60 = vld [vmem:[#allocation2 + $0xf8] sm:$0xff]
    %v61 = vadd.f32 %v29, %v30
    %62 = vadd.xlane.f32.xlu0 %v61
    %v63 = vpop.xlane.xlu0 %62
    %v64 = vadd.f32 %v31, %v32
    %65 = vadd.xlane.f32.xlu0 %v64
    %v66 = vpop.xlane.xlu0 %65
    %v67 = vadd.f32 %v33, %v34
    %68 = vadd.xlane.f32.xlu0 %v67
    %v69 = vpop.xlane.xlu0 %68
    %v70 = vadd.f32 %v35, %v36
    %71 = vadd.xlane.f32.xlu0 %v70
    %v72 = vpop.xlane.xlu0 %71
    %v73 = vadd.f32 %v37, %v38
    %74 = vadd.xlane.f32.xlu0 %v73
    %v75 = vpop.xlane.xlu0 %74
    %v76 = vadd.f32 %v39, %v40
    %77 = vadd.xlane.f32.xlu0 %v76
    %v78 = vpop.xlane.xlu0 %77
    %v79 = vadd.f32 %v41, %v42
    %80 = vadd.xlane.f32.xlu0 %v79
    %v81 = vpop.xlane.xlu0 %80
    %v82 = vadd.f32 %v43, %v44
    %83 = vadd.xlane.f32.xlu0 %v82
    %v84 = vpop.xlane.xlu0 %83
    %v85 = vadd.f32 %v45, %v46
    %86 = vadd.xlane.f32.xlu0 %v85
    %v87 = vpop.xlane.xlu0 %86
    %v88 = vadd.f32 %v47, %v48
    %89 = vadd.xlane.f32.xlu0 %v88
    %v90 = vpop.xlane.xlu0 %89
    %v91 = vadd.f32 %v49, %v50
    %92 = vadd.xlane.f32.xlu0 %v91
    %v93 = vpop.xlane.xlu0 %92
    %v94 = vadd.f32 %v51, %v52
    %95 = vadd.xlane.f32.xlu0 %v94
    %v96 = vpop.xlane.xlu0 %95
    %v97 = vadd.f32 %v53, %v54
    %98 = vadd.xlane.f32.xlu0 %v97
    %v99 = vpop.xlane.xlu0 %98
    %v100 = vadd.f32 %v55, %v56
    %101 = vadd.xlane.f32.xlu0 %v100
    %v102 = vpop.xlane.xlu0 %101
    %v103 = vadd.f32 %v57, %v58
    %104 = vadd.xlane.f32.xlu0 %v103
    %v105 = vpop.xlane.xlu0 %104
    %v106 = vadd.f32 %v59, %v60
    %107 = vadd.xlane.f32.xlu0 %v106
    %v108 = vpop.xlane.xlu0 %107
    %v109 = vld [vmem:[%s1] sm:$0xff]
    %v110 = vld [vmem:[%s1 + $0x8] sm:$0xff]
    %v111 = vld [vmem:[%s1 + $0x10] sm:$0xff]
    %v112 = vld [vmem:[%s1 + $0x18] sm:$0xff]
    %v113 = vld [vmem:[%s1 + $0x20] sm:$0xff]
    %v114 = vld [vmem:[%s1 + $0x28] sm:$0xff]
    %v115 = vld [vmem:[%s1 + $0x30] sm:$0xff]
    %v116 = vld [vmem:[%s1 + $0x38] sm:$0xff]
    %v133 = vlaneseq
    %v134 = vand.u32 %v133, 127
    %v135 = vlaneseq
    %v136 = vshrl.u32 %v135, 7
    %v137 = vsub.s32 %v134, %v136
    %v138 = vrot.slane %v63, %v137
    %v139 = vadd.s32 %v134, 4294967288
    %v140 = vlaneseq
    %v141 = vshrl.u32 %v140, 7
    %v142 = vsub.s32 %v139, %v141
    %v143 = vrot.slane %v66, %v142
    %vm144 = vcmask 130112
    %v145 = vsel %vm144, %v143, %v138
    %v146 = vadd.s32 %v134, 4294967280
    %v147 = vlaneseq
    %v148 = vshrl.u32 %v147, 7
    %v149 = vsub.s32 %v146, %v148
    %v150 = vrot.slane %v69, %v149
    %vm151 = vcmask 195712
    %v152 = vsel %vm151, %v150, %v145
    %v153 = vadd.s32 %v134, 4294967272
    %v154 = vlaneseq
    %v155 = vshrl.u32 %v154, 7
    %v156 = vsub.s32 %v153, %v155
    %v157 = vrot.slane %v72, %v156
    %vm158 = vcmask 261312
    %v159 = vsel %vm158, %v157, %v152
    %v160 = vadd.s32 %v134, 4294967264
    %v161 = vlaneseq
    %v162 = vshrl.u32 %v161, 7
    %v163 = vsub.s32 %v160, %v162
    %v164 = vrot.slane %v75, %v163
    %vm165 = vcmask 326912
    %v166 = vsel %vm165, %v164, %v159
    %v167 = vadd.s32 %v134, 4294967256
    %v168 = vlaneseq
    %v169 = vshrl.u32 %v168, 7
    %v170 = vsub.s32 %v167, %v169
    %v171 = vrot.slane %v78, %v170
    %vm172 = vcmask 392512
    %v173 = vsel %vm172, %v171, %v166
    %v174 = vadd.s32 %v134, 4294967248
    %v175 = vlaneseq
    %v176 = vshrl.u32 %v175, 7
    %v177 = vsub.s32 %v174, %v176
    %v178 = vrot.slane %v81, %v177
    %vm179 = vcmask 458112
    %v180 = vsel %vm179, %v178, %v173
    %v181 = vadd.s32 %v134, 4294967240
    %v182 = vlaneseq
    %v183 = vshrl.u32 %v182, 7
    %v184 = vsub.s32 %v181, %v183
    %v185 = vrot.slane %v84, %v184
    %vm186 = vcmask 523712
    %v187 = vsel %vm186, %v185, %v180
    %v188 = vlaneseq
    %v189 = vshrl.u32 %v188, 7
    %v190 = vsub.s32 %v134, %v189
    %v191 = vrot.slane %v87, %v190
    %v192 = vlaneseq
    %v193 = vshrl.u32 %v192, 7
    %v194 = vsub.s32 %v139, %v193
    %v195 = vrot.slane %v90, %v194
    %v196 = vsel %vm144, %v195, %v191
    %v197 = vlaneseq
    %v198 = vshrl.u32 %v197, 7
    %v199 = vsub.s32 %v146, %v198
    %v200 = vrot.slane %v93, %v199
    %v201 = vsel %vm151, %v200, %v196
    %v202 = vlaneseq
    %v203 = vshrl.u32 %v202, 7
    %v204 = vsub.s32 %v153, %v203
    %v205 = vrot.slane %v96, %v204
    %v206 = vsel %vm158, %v205, %v201
    %v207 = vlaneseq
    %v208 = vshrl.u32 %v207, 7
    %v209 = vsub.s32 %v160, %v208
    %v210 = vrot.slane %v99, %v209
    %v211 = vsel %vm165, %v210, %v206
    %v212 = vlaneseq
    %v213 = vshrl.u32 %v212, 7
    %v214 = vsub.s32 %v167, %v213
    %v215 = vrot.slane %v102, %v214
    %v216 = vsel %vm172, %v215, %v211
    %v217 = vlaneseq
    %v218 = vshrl.u32 %v217, 7
    %v219 = vsub.s32 %v174, %v218
    %v220 = vrot.slane %v105, %v219
    %v221 = vsel %vm179, %v220, %v216
    %v222 = vlaneseq
    %v223 = vshrl.u32 %v222, 7
    %v224 = vsub.s32 %v181, %v223
    %v225 = vrot.slane %v108, %v224
    %v226 = vsel %vm186, %v225, %v221
    %vm227 = vcmask 1041409
    %v228 = vsel %vm227, %v226, %v187
    %vm229 = vcmask 523264
    %v230 = vsel %vm229, %v228, 0
    %232 = vmatprep.subr.mxu0 0.0
    %233 = vmatpush1.msra.mxu0 %v109
    %234 = vmatprep.subr.mxu0 0.0
    %235 = vmatpush1.msra.mxu0 %v110
    %236 = vmatprep.subr.mxu0 0.0
    %237 = vmatpush1.msra.mxu0 %v111
    %238 = vmatprep.subr.mxu0 0.0
    %239 = vmatpush1.msra.mxu0 %v112
    %240 = vmatprep.subr.mxu0 0.0
    %241 = vmatpush1.msra.mxu0 %v113
    %242 = vmatprep.subr.mxu0 0.0
    %243 = vmatpush1.msra.mxu0 %v114
    %244 = vmatprep.subr.mxu0 0.0
    %245 = vmatpush1.msra.mxu0 %v115
    %246 = vmatprep.subr.mxu0 0.0
    %247 = vmatpush1.msra.mxu0 %v116
    %248 = vmatprep.subr.mxu0 0.0
    %249 = vmatpush1.msra.mxu0 0.0
    %250 = vmatprep.subr.mxu0 0.0
    %251 = vmatpush1.msra.mxu0 0.0
    %252 = vmatprep.subr.mxu0 0.0
    %253 = vmatpush1.msra.mxu0 0.0
    %254 = vmatprep.subr.mxu0 0.0
    %255 = vmatpush1.msra.mxu0 0.0
    %256 = vmatprep.subr.mxu0 0.0
    %257 = vmatpush1.msra.mxu0 0.0
    %258 = vmatprep.subr.mxu0 0.0
    %259 = vmatpush1.msra.mxu0 0.0
    %260 = vmatprep.subr.mxu0 0.0
    %261 = vmatpush1.msra.mxu0 0.0
    %262 = vmatprep.subr.mxu0 0.0
    %263 = vmatpush1.msra.mxu0 0.0
    %264 = vmatprep.subr.mxu0 0.0
    %265 = vmatpush1.msra.mxu0 0.0
    %266 = vmatprep.subr.mxu0 0.0
    %267 = vmatpush1.msra.mxu0 0.0
    %268 = vmatprep.subr.mxu0 0.0
    %269 = vmatpush1.msra.mxu0 0.0
    %270 = vmatprep.subr.mxu0 0.0
    %271 = vmatpush1.msra.mxu0 0.0
    %272 = vmatprep.subr.mxu0 0.0
    %273 = vmatpush1.msra.mxu0 0.0
    %274 = vmatprep.subr.mxu0 0.0
    %275 = vmatpush1.msra.mxu0 0.0
    %276 = vmatprep.subr.mxu0 0.0
    %277 = vmatpush1.msra.mxu0 0.0
    %278 = vmatprep.subr.mxu0 0.0
    %279 = vmatpush1.msra.mxu0 0.0
    %280 = vmatprep.subr.mxu0 0.0
    %281 = vmatpush1.msra.mxu0 0.0
    %282 = vmatprep.subr.mxu0 0.0
    %283 = vmatpush1.msra.mxu0 0.0
    %284 = vmatprep.subr.mxu0 0.0
    %285 = vmatpush1.msra.mxu0 0.0
    %286 = vmatprep.subr.mxu0 0.0
    %287 = vmatpush1.msra.mxu0 0.0
    %288 = vmatprep.subr.mxu0 0.0
    %289 = vmatpush1.msra.mxu0 0.0
    %290 = vmatprep.subr.mxu0 0.0
    %291 = vmatpush1.msra.mxu0 0.0
    %292 = vmatprep.subr.mxu0 0.0
    %293 = vmatpush1.msra.mxu0 0.0
    %294 = vmatprep.subr.mxu0 0.0
    %295 = vmatpush1.msra.mxu0 0.0
    %296 = vmatprep.mubr.f32.mxu0 0.0
    %297 = vmatmul.mubr.f32.gmra.mrb[0].mxu0 %v230
    %v298 = vpop.f32.mrb[0].mxu0
    %v299 = vadd.f32 0.0, %v298
    %v300 = vpop.f32.mrb[0].mxu0
    %301 = vdwg.mxu0
    %v302 = vmax.f32 %v299, 0.0
    %v303 = vld [vmem:[%s2] sm:$0xf]
    %vm304 = vcmask 31744
    %v306 = vsel %vm304, %v302, 0
    %vm308 = vcmask 1043456
    %v310 = vsel %vm308, %v303, 0
    %312 = vmatprep.subr.mxu0 0.0
    %313 = vmatpush1.msra.mxu0 %v310
    %314 = vmatprep.subr.mxu0 0.0
    %315 = vmatpush1.msra.mxu0 0.0
    %316 = vmatprep.subr.mxu0 0.0
    %317 = vmatpush1.msra.mxu0 0.0
    %318 = vmatprep.subr.mxu0 0.0
    %319 = vmatpush1.msra.mxu0 0.0
    %320 = vmatprep.subr.mxu0 0.0
    %321 = vmatpush1.msra.mxu0 0.0
    %322 = vmatprep.subr.mxu0 0.0
    %323 = vmatpush1.msra.mxu0 0.0
    %324 = vmatprep.subr.mxu0 0.0
    %325 = vmatpush1.msra.mxu0 0.0
    %326 = vmatprep.subr.mxu0 0.0
    %327 = vmatpush1.msra.mxu0 0.0
    %328 = vmatprep.subr.mxu0 0.0
    %329 = vmatpush1.msra.mxu0 0.0
    %330 = vmatprep.subr.mxu0 0.0
    %331 = vmatpush1.msra.mxu0 0.0
    %332 = vmatprep.subr.mxu0 0.0
    %333 = vmatpush1.msra.mxu0 0.0
    %334 = vmatprep.subr.mxu0 0.0
    %335 = vmatpush1.msra.mxu0 0.0
    %336 = vmatprep.subr.mxu0 0.0
    %337 = vmatpush1.msra.mxu0 0.0
    %338 = vmatprep.subr.mxu0 0.0
    %339 = vmatpush1.msra.mxu0 0.0
    %340 = vmatprep.subr.mxu0 0.0
    %341 = vmatpush1.msra.mxu0 0.0
    %342 = vmatprep.subr.mxu0 0.0
    %343 = vmatpush1.msra.mxu0 0.0
    %344 = vmatprep.subr.mxu0 0.0
    %345 = vmatpush1.msra.mxu0 0.0
    %346 = vmatprep.subr.mxu0 0.0
    %347 = vmatpush1.msra.mxu0 0.0
    %348 = vmatprep.subr.mxu0 0.0
    %349 = vmatpush1.msra.mxu0 0.0
    %350 = vmatprep.subr.mxu0 0.0
    %351 = vmatpush1.msra.mxu0 0.0
    %352 = vmatprep.subr.mxu0 0.0
    %353 = vmatpush1.msra.mxu0 0.0
    %354 = vmatprep.subr.mxu0 0.0
    %355 = vmatpush1.msra.mxu0 0.0
    %356 = vmatprep.subr.mxu0 0.0
    %357 = vmatpush1.msra.mxu0 0.0
    %358 = vmatprep.subr.mxu0 0.0
    %359 = vmatpush1.msra.mxu0 0.0
    %360 = vmatprep.subr.mxu0 0.0
    %361 = vmatpush1.msra.mxu0 0.0
    %362 = vmatprep.subr.mxu0 0.0
    %363 = vmatpush1.msra.mxu0 0.0
    %364 = vmatprep.subr.mxu0 0.0
    %365 = vmatpush1.msra.mxu0 0.0
    %366 = vmatprep.subr.mxu0 0.0
    %367 = vmatpush1.msra.mxu0 0.0
    %368 = vmatprep.subr.mxu0 0.0
    %369 = vmatpush1.msra.mxu0 0.0
    %370 = vmatprep.subr.mxu0 0.0
    %371 = vmatpush1.msra.mxu0 0.0
    %372 = vmatprep.subr.mxu0 0.0
    %373 = vmatpush1.msra.mxu0 0.0
    %374 = vmatprep.subr.mxu0 0.0
    %375 = vmatpush1.msra.mxu0 0.0
    %376 = vmatprep.mubr.f32.mxu0 0.0
    %377 = vmatmul.mubr.f32.gmra.mrb[0].mxu0 %v306
    %v378 = vpop.f32.mrb[0].mxu0
    %v379 = vadd.f32 0.0, %v378
    %v380 = vpop.f32.mrb[0].mxu0
    %381 = vdwg.mxu0
    %v382 = vxor.u32 %v379, 2147483648
    %v383 = vmul.f32 %v382, 1.442695
    %v384 = vpow.pop %v383
    %v385 = vadd.f32 %v384, 1.0
    %v386 = vrcp.pop %v385
    %v387 = vmul.f32 1.0, %v386
    %v388 = vlaneseq
    %v389 = vshrl.u32 %v388, 7
    %v390 = vsub.s32 0, %v389
    %v391 = vrot.slane %v387, %v390
    %393 = vbcast.lane.b32.xlu0 %v391, 256
    %v394 = vpop.permute.xlu0 %393
    %s396 = sor.u32 256, 8
    %397 = vbcast.lane.b32.xlu0 %v391, %s396
    %v398 = vpop.permute.xlu0 %397
    %s400 = sor.u32 256, 16
    %401 = vbcast.lane.b32.xlu0 %v391, %s400
    %v402 = vpop.permute.xlu0 %401
    %s404 = sor.u32 256, 24
    %405 = vbcast.lane.b32.xlu0 %v391, %s404
    %v406 = vpop.permute.xlu0 %405
    %s408 = sor.u32 256, 32
    %409 = vbcast.lane.b32.xlu0 %v391, %s408
    %v410 = vpop.permute.xlu0 %409
    %s412 = sor.u32 256, 40
    %413 = vbcast.lane.b32.xlu0 %v391, %s412
    %v414 = vpop.permute.xlu0 %413
    %s416 = sor.u32 256, 48
    %417 = vbcast.lane.b32.xlu0 %v391, %s416
    %v418 = vpop.permute.xlu0 %417
    %s420 = sor.u32 256, 56
    %421 = vbcast.lane.b32.xlu0 %v391, %s420
    %v422 = vpop.permute.xlu0 %421
    %v423 = vlaneseq
    %v424 = vshrl.u32 %v423, 7
    %v425 = vsub.s32 1, %v424
    %v426 = vrot.slane %v387, %v425
    %428 = vbcast.lane.b32.xlu0 %v426, 256
    %v429 = vpop.permute.xlu0 %428
    %s431 = sor.u32 256, 8
    %432 = vbcast.lane.b32.xlu0 %v426, %s431
    %v433 = vpop.permute.xlu0 %432
    %s435 = sor.u32 256, 16
    %436 = vbcast.lane.b32.xlu0 %v426, %s435
    %v437 = vpop.permute.xlu0 %436
    %s439 = sor.u32 256, 24
    %440 = vbcast.lane.b32.xlu0 %v426, %s439
    %v441 = vpop.permute.xlu0 %440
    %s443 = sor.u32 256, 32
    %444 = vbcast.lane.b32.xlu0 %v426, %s443
    %v445 = vpop.permute.xlu0 %444
    %s447 = sor.u32 256, 40
    %448 = vbcast.lane.b32.xlu0 %v426, %s447
    %v449 = vpop.permute.xlu0 %448
    %s451 = sor.u32 256, 48
    %452 = vbcast.lane.b32.xlu0 %v426, %s451
    %v453 = vpop.permute.xlu0 %452
    %s455 = sor.u32 256, 56
    %456 = vbcast.lane.b32.xlu0 %v426, %s455
    %v457 = vpop.permute.xlu0 %456
    %v458 = vmul.f32 %v29, %v394
    %v459 = vmul.f32 %v30, %v394
    %v460 = vmul.f32 %v31, %v398
    %v461 = vmul.f32 %v32, %v398
    %v462 = vmul.f32 %v33, %v402
    %v463 = vmul.f32 %v34, %v402
    %v464 = vmul.f32 %v35, %v406
    %v465 = vmul.f32 %v36, %v406
    %v466 = vmul.f32 %v37, %v410
    %v467 = vmul.f32 %v38, %v410
    %v468 = vmul.f32 %v39, %v414
    %v469 = vmul.f32 %v40, %v414
    %v470 = vmul.f32 %v41, %v418
    %v471 = vmul.f32 %v42, %v418
    %v472 = vmul.f32 %v43, %v422
    %v473 = vmul.f32 %v44, %v422
    %v474 = vmul.f32 %v45, %v429
    %v475 = vmul.f32 %v46, %v429
    %v476 = vmul.f32 %v47, %v433
    %v477 = vmul.f32 %v48, %v433
    %v478 = vmul.f32 %v49, %v437
    %v479 = vmul.f32 %v50, %v437
    %v480 = vmul.f32 %v51, %v441
    %v481 = vmul.f32 %v52, %v441
    %v482 = vmul.f32 %v53, %v445
    %v483 = vmul.f32 %v54, %v445
    %v484 = vmul.f32 %v55, %v449
    %v485 = vmul.f32 %v56, %v449
    %v486 = vmul.f32 %v57, %v453
    %v487 = vmul.f32 %v58, %v453
    %v488 = vmul.f32 %v59, %v457
    %v489 = vmul.f32 %v60, %v457
    %490 = vst [vmem:[#allocation5] sm:$0xff] %v458
    %491 = vst [vmem:[#allocation5 + $0x8] sm:$0xff] %v459
    %492 = vst [vmem:[#allocation5 + $0x10] sm:$0xff] %v460
    %493 = vst [vmem:[#allocation5 + $0x18] sm:$0xff] %v461
    %494 = vst [vmem:[#allocation5 + $0x20] sm:$0xff] %v462
    %495 = vst [vmem:[#allocation5 + $0x28] sm:$0xff] %v463
    %496 = vst [vmem:[#allocation5 + $0x30] sm:$0xff] %v464
    %497 = vst [vmem:[#allocation5 + $0x38] sm:$0xff] %v465
    %498 = vst [vmem:[#allocation5 + $0x40] sm:$0xff] %v466
    %499 = vst [vmem:[#allocation5 + $0x48] sm:$0xff] %v467
    %500 = vst [vmem:[#allocation5 + $0x50] sm:$0xff] %v468
    %501 = vst [vmem:[#allocation5 + $0x58] sm:$0xff] %v469
    %502 = vst [vmem:[#allocation5 + $0x60] sm:$0xff] %v470
    %503 = vst [vmem:[#allocation5 + $0x68] sm:$0xff] %v471
    %504 = vst [vmem:[#allocation5 + $0x70] sm:$0xff] %v472
    %505 = vst [vmem:[#allocation5 + $0x78] sm:$0xff] %v473
    %506 = vst [vmem:[#allocation5 + $0x80] sm:$0xff] %v474
    %507 = vst [vmem:[#allocation5 + $0x88] sm:$0xff] %v475
    %508 = vst [vmem:[#allocation5 + $0x90] sm:$0xff] %v476
    %509 = vst [vmem:[#allocation5 + $0x98] sm:$0xff] %v477
    %510 = vst [vmem:[#allocation5 + $0xa0] sm:$0xff] %v478
    %511 = vst [vmem:[#allocation5 + $0xa8] sm:$0xff] %v479
    %512 = vst [vmem:[#allocation5 + $0xb0] sm:$0xff] %v480
    %513 = vst [vmem:[#allocation5 + $0xb8] sm:$0xff] %v481
    %514 = vst [vmem:[#allocation5 + $0xc0] sm:$0xff] %v482
    %515 = vst [vmem:[#allocation5 + $0xc8] sm:$0xff] %v483
    %516 = vst [vmem:[#allocation5 + $0xd0] sm:$0xff] %v484
    %517 = vst [vmem:[#allocation5 + $0xd8] sm:$0xff] %v485
    %518 = vst [vmem:[#allocation5 + $0xe0] sm:$0xff] %v486
    %519 = vst [vmem:[#allocation5 + $0xe8] sm:$0xff] %v487
    %520 = vst [vmem:[#allocation5 + $0xf0] sm:$0xff] %v488
    %521 = vst [vmem:[#allocation5 + $0xf8] sm:$0xff] %v489
    // Predicated region
    $region18: #{tpu_custom_call.1} parent=1 // pred_check
      _
    $region19: #{tpu_custom_call.1} parent=1 // pred_check_branch
      %523 = sbr.rel (0) target = $region21
    $region20: #{tpu_custom_call.1} parent=1 // pred_region
      %s525 = ssub.s32 4096, 4096
      %526 = vsyncadd [#allocation4], %s525
      %s527 = sshll.u32 [#allocation5], 4
      %s528 = int_to_ptr.vmem [resolvable:$true] %s527
      %533 = dma.vmem_to_hbm [thread:$0]  %s528, 4096, %s3, [#allocation4], 256, 256, 16
    $region21: #{tpu_custom_call.1} parent=1 // pred_fallthru
      _
    // Predicated region
    $region22: #{tpu_custom_call.1} parent=1 // pred_check
      _
    $region23: #{tpu_custom_call.1} parent=1 // pred_check_branch
      %535 = sbr.rel (0) target = $region25
    $region24: #{tpu_custom_call.1} parent=1 // pred_region
      %536 = dma.done [#allocation4], 4096
    $region25: #{tpu_custom_call.1} parent=1 // pred_fallthru
      _
    %537 = vsyncpa [#allocation3], 1
    %538 = vsyncpa [#allocation4], 1

</llo_original>
